<compile_context>
chip_gen: v7x
topology: tpu7x:2x2x1
jax: 0.10.0
libtpu: 0.0.40
codegen_flags: <defaults>
</compile_context>

<pallas_src>
import functools

import jax
import jax.numpy as jnp
from jax.experimental import pallas as pl
from jax.experimental.pallas import tpu as pltpu

LN_EPS = 1e-5  # nn.LayerNorm default


def _round_up(x, m):
    return (x + m - 1) // m * m


def _patch_embed_kernel(x_ref, w_ref, p_ref, o_ref, *, d_real):
    # x_ref: (TM, K_pad)     bf16 patch rows for this grid step
    # w_ref: (K_pad, D_pad)  bf16 flattened conv weight (resident across grid)
    # p_ref: (8, D_pad) f32  row0=conv bias, row1=LN gamma, row2=LN beta,
    #                        row3=lane-validity mask (1.0 on real lanes)
    # o_ref: (TM, D_pad)
    y = jnp.dot(x_ref[...], w_ref[...], preferred_element_type=jnp.float32)
    y = y + p_ref[0:1, :]                              # conv bias (f32)

    d_pad = y.shape[-1]
    inv_d = jnp.float32(1.0 / d_real)
    # Padded lanes of y are exactly 0 (zero-padded weight columns & bias), so
    # summing over all lanes and dividing by the *real* d_model gives the true
    # mean.  Keep that invariant if the padding scheme ever changes.
    mean = jnp.sum(y, axis=-1, keepdims=True) * inv_d
    centered = y - mean
    if d_pad != d_real:
        centered = centered * p_ref[3:4, :]            # zero pad lanes (mask)
    var = jnp.sum(centered * centered, axis=-1, keepdims=True) * inv_d
    normed = centered * jax.lax.rsqrt(var + LN_EPS)
    o_ref[...] = (normed * p_ref[1:2, :] + p_ref[2:3, :]).astype(o_ref.dtype)


@functools.partial(jax.jit, static_argnames=("patch_size", "mm_dtype"))
def patch_embedding(x, conv_w, conv_b, ln_gamma, ln_beta, *, patch_size,
                    mm_dtype=jnp.bfloat16):
    """x: (B, C, H, W) NCHW. conv_w: (d_model, C, P, P). Returns (B, N, d_model)."""
    B, C, H, W = x.shape
    D = conv_w.shape[0]
    P = patch_size
    Hp, Wp = H // P, W // P
    N = Hp * Wp
    K = C * P * P
    rows = B * N

    # Lane-dense padding targets (last dims multiples of 128).
    K_pad = _round_up(K, 128)
    D_pad = _round_up(D, 128)

    out_dtype = x.dtype
    in_itemsize = jnp.dtype(mm_dtype).itemsize
    out_itemsize = jnp.dtype(out_dtype).itemsize

    # ---- VMEM budget derived from the chip (fallback: v7x's 64 MiB) ---------
    try:
        vmem_cap = int(pltpu.get_tpu_info().vmem_capacity_bytes)
    except Exception:
        vmem_cap = 64 * 1024 * 1024
    budget = vmem_cap // 2                                   # headroom for Mosaic scratch
    vmem_limit = min(int(vmem_cap * 0.75), vmem_cap - 8 * 1024 * 1024)

    # Live-VMEM estimate:
    #   fixed   : double-buffered resident weight + params
    #   per-row : double-buffered in/out tiles + f32 LN temps (y/centered/normed)
    fixed = 2 * K_pad * D_pad * in_itemsize + 2 * 8 * D_pad * 4
    per_row = (2 * K_pad * in_itemsize
               + 2 * D_pad * out_itemsize
               + 3 * D_pad * 4)

    tm = 1024                          # multiple of 256: good MXU cadence on all gens
    while tm > 256 and fixed + tm * per_row > budget:
        tm //= 2
    # Don't blow tiny problems up to a huge zero-padded tile, and give the v7x
    # megacore split >= 2 grid steps when possible.  TM stays a multiple of 16
    # (bf16 sublane packing); large problems keep the 256-multiple from above.
    if rows <= tm:
        if rows > 16:
            tm = max(16, _round_up(pl.cdiv(rows, 2), 16))
        else:
            tm = max(16, _round_up(rows, 16))
    rows_pad = _round_up(rows, tm)
    grid = (rows_pad // tm,)

    # ---- patch extraction (conv / flatten(2) / transpose(1,2) ordering) -----
    # (B,C,Hp,P,Wp,P) -> (B,Hp,Wp,C,P,P) -> (B*N, K), cast to bf16 *before*
    # padding so any materialized copy is half-sized; allow_input_fusion asks
    # XLA to fuse this into the Pallas input DMA instead of an HBM round trip.
    xp = x.reshape(B, C, Hp, P, Wp, P)
    xp = jnp.transpose(xp, (0, 2, 4, 1, 3, 5)).reshape(rows, K).astype(mm_dtype)
    xp = jnp.pad(xp, ((0, rows_pad - rows), (0, K_pad - K)))

    # conv weight (D,C,P,P) -> (K_pad, D_pad) bf16; zero padding keeps the dot
    # (and the un-masked LN mean) exact.
    w2d = conv_w.reshape(D, K).T.astype(mm_dtype)
    w2d = jnp.pad(w2d, ((0, K_pad - K), (0, D_pad - D)))

    # Pack bias / gamma / beta / lane mask into one sublane-aligned f32 buffer.
    params = jnp.zeros((8, D_pad), jnp.float32)
    params = params.at[0, :D].set(conv_b.astype(jnp.float32))
    params = params.at[1, :D].set(ln_gamma.astype(jnp.float32))
    params = params.at[2, :D].set(ln_beta.astype(jnp.float32))
    params = params.at[3, :D].set(1.0)        # validity mask for the LN variance

    kernel = functools.partial(_patch_embed_kernel, d_real=D)
    out = pl.pallas_call(
        kernel,
        out_shape=jax.ShapeDtypeStruct((rows_pad, D_pad), out_dtype),
        grid=grid,
        in_specs=[
            pl.BlockSpec((tm, K_pad), lambda i: (i, 0)),     # patch rows (tiled)
            pl.BlockSpec((K_pad, D_pad), lambda i: (0, 0)),  # weight (resident)
            pl.BlockSpec((8, D_pad), lambda i: (0, 0)),      # bias/gamma/beta/mask
        ],
        out_specs=pl.BlockSpec((tm, D_pad), lambda i: (i, 0)),
        compiler_params=pltpu.CompilerParams(
            dimension_semantics=("parallel",),      # row axis shards over TCs
            vmem_limit_bytes=vmem_limit,
            allow_input_fusion=[True, False, False],
        ),
    )(xp, w2d, params)

    if rows_pad == rows and D_pad == D:
        return out.reshape(B, N, D)                 # no padding -> no slice copy
    return out[:rows, :D].reshape(B, N, D)


def _reference(x, conv_w, conv_b, ln_gamma, ln_beta, patch_size):
    """Plain-JAX f32 reference matching the PyTorch module."""
    B, C, H, W = x.shape
    D = conv_w.shape[0]
    P = patch_size
    Hp, Wp = H // P, W // P
    xp = x.reshape(B, C, Hp, P, Wp, P)
    xp = jnp.transpose(xp, (0, 2, 4, 1, 3, 5)).reshape(B, Hp * Wp, C * P * P)
    y = jnp.einsum("bnk,dk->bnd", xp, conv_w.reshape(D, -1)) + conv_b
    mean = jnp.mean(y, axis=-1, keepdims=True)
    var = jnp.mean((y - mean) ** 2, axis=-1, keepdims=True)
    return (y - mean) / jnp.sqrt(var + LN_EPS) * ln_gamma + ln_beta


if __name__ == "__main__":
    # Small, deterministic config: d_model=32, img 16x16, patch 4, channels 4.
    d_model, img_size, patch_size, n_channels = 32, 16, 4, 4
    batch = 2

    key = jax.random.PRNGKey(0)
    k_x, k_w, k_b, k_g, k_beta = jax.random.split(key, 5)

    x = jax.random.normal(k_x, (batch, n_channels, img_size, img_size),
                          dtype=jnp.float32)
    conv_w = 0.05 * jax.random.normal(
        k_w, (d_model, n_channels, patch_size, patch_size), dtype=jnp.float32)
    conv_b = 0.05 * jax.random.normal(k_b, (d_model,), dtype=jnp.float32)
    ln_gamma = 1.0 + 0.05 * jax.random.normal(k_g, (d_model,), dtype=jnp.float32)
    ln_beta = 0.05 * jax.random.normal(k_beta, (d_model,), dtype=jnp.float32)

    out = patch_embedding(x, conv_w, conv_b, ln_gamma, ln_beta,
                          patch_size=patch_size)
    out = jax.block_until_ready(out)

    ref = _reference(x, conv_w, conv_b, ln_gamma, ln_beta, patch_size)
    assert out.shape == (batch, (img_size // patch_size) ** 2, d_model)
    # Matmul operands are bf16 (MXU-native); LN/accumulation are f32, so the
    # result matches the f32 reference to bf16 input precision.
    assert jnp.allclose(out, ref, atol=2e-2, rtol=2e-2)

    print("KERNEL_OK")
</pallas_src>

<mosaic_0001>
module attributes {stable_mosaic.version = 11 : i64} {
  func.func @_patch_embed_kernel(%arg0: i32, %arg1: memref<16x128xbf16, #tpu.memory_space<vmem>>, %arg2: memref<128x128xbf16, #tpu.memory_space<vmem>>, %arg3: memref<8x128xf32, #tpu.memory_space<vmem>>, %arg4: memref<16x128xf32, #tpu.memory_space<vmem>>) attributes {dimension_semantics = [#tpu.dimension_semantics<parallel>], iteration_bounds = array<i64: 2>, scalar_prefetch = 0 : i64, scratch_operands = 0 : i64, tpu.core_type = #tpu.core_type<tc>, window_params = [{transform_indices = @transform_0, window_bounds = array<i64: 16, 128>}, {pipeline_mode = #tpu.pipeline_mode<synchronous>, transform_indices = @transform_1, window_bounds = array<i64: 128, 128>}, {pipeline_mode = #tpu.pipeline_mode<synchronous>, transform_indices = @transform_2, window_bounds = array<i64: 8, 128>}, {transform_indices = @transform_3, window_bounds = array<i64: 16, 128>}]} {
    %c0 = arith.constant 0 : index
    %c0_0 = arith.constant 0 : index
    %0 = vector.load %arg1[%c0, %c0_0] : memref<16x128xbf16, #tpu.memory_space<vmem>>, vector<16x128xbf16>
    %c0_1 = arith.constant 0 : index
    %c0_2 = arith.constant 0 : index
    %1 = vector.load %arg2[%c0_1, %c0_2] : memref<128x128xbf16, #tpu.memory_space<vmem>>, vector<128x128xbf16>
    %cst = arith.constant dense<0.000000e+00> : vector<16x128xf32>
    %2 = tpu.matmul %0, %1, %cst {dimension_numbers = #tpu.dot_dimension_numbers<[1], [0], [0], [1], [0, 0, 1, 1], [], []>} : vector<16x128xbf16>, vector<128x128xbf16>, vector<16x128xf32> -> vector<16x128xf32>
    %c0_3 = arith.constant 0 : index
    %c0_4 = arith.constant 0 : index
    %3 = vector.load %arg3[%c0_3, %c0_4] : memref<8x128xf32, #tpu.memory_space<vmem>>, vector<1x128xf32>
    %4 = vector.broadcast %3 : vector<1x128xf32> to vector<16x128xf32>
    %5 = arith.addf %2, %4 : vector<16x128xf32>
    %cst_5 = arith.constant dense<0.000000e+00> : vector<16xf32>
    %6 = vector.multi_reduction <add>, %5, %cst_5 [1] : vector<16x128xf32> to vector<16xf32>
    %7 = vector.shape_cast %6 : vector<16xf32> to vector<16x1xf32>
    %cst_6 = arith.constant 3.125000e-02 : f32
    %8 = vector.broadcast %cst_6 : f32 to vector<16x1xf32>
    %9 = arith.mulf %7, %8 : vector<16x1xf32>
    %10 = vector.broadcast %9 : vector<16x1xf32> to vector<16x128xf32>
    %11 = arith.subf %5, %10 : vector<16x128xf32>
    %c3 = arith.constant 3 : index
    %c0_7 = arith.constant 0 : index
    %12 = vector.load %arg3[%c3, %c0_7] : memref<8x128xf32, #tpu.memory_space<vmem>>, vector<1x128xf32>
    %13 = vector.broadcast %12 : vector<1x128xf32> to vector<16x128xf32>
    %14 = arith.mulf %11, %13 : vector<16x128xf32>
    %15 = arith.mulf %14, %14 : vector<16x128xf32>
    %cst_8 = arith.constant dense<0.000000e+00> : vector<16xf32>
    %16 = vector.multi_reduction <add>, %15, %cst_8 [1] : vector<16x128xf32> to vector<16xf32>
    %17 = vector.shape_cast %16 : vector<16xf32> to vector<16x1xf32>
    %cst_9 = arith.constant 3.125000e-02 : f32
    %18 = vector.broadcast %cst_9 : f32 to vector<16x1xf32>
    %19 = arith.mulf %17, %18 : vector<16x1xf32>
    %cst_10 = arith.constant 9.99999974E-6 : f32
    %20 = vector.broadcast %cst_10 : f32 to vector<16x1xf32>
    %21 = arith.addf %19, %20 : vector<16x1xf32>
    %22 = math.rsqrt %21 : vector<16x1xf32>
    %23 = vector.broadcast %22 : vector<16x1xf32> to vector<16x128xf32>
    %24 = arith.mulf %14, %23 : vector<16x128xf32>
    %c1 = arith.constant 1 : index
    %c0_11 = arith.constant 0 : index
    %25 = vector.load %arg3[%c1, %c0_11] : memref<8x128xf32, #tpu.memory_space<vmem>>, vector<1x128xf32>
    %26 = vector.broadcast %25 : vector<1x128xf32> to vector<16x128xf32>
    %27 = arith.mulf %24, %26 : vector<16x128xf32>
    %c2 = arith.constant 2 : index
    %c0_12 = arith.constant 0 : index
    %28 = vector.load %arg3[%c2, %c0_12] : memref<8x128xf32, #tpu.memory_space<vmem>>, vector<1x128xf32>
    %29 = vector.broadcast %28 : vector<1x128xf32> to vector<16x128xf32>
    %30 = arith.addf %27, %29 : vector<16x128xf32>
    %c0_13 = arith.constant 0 : index
    %c0_14 = arith.constant 0 : index
    %31 = vector.load %arg4[%c0_13, %c0_14] : memref<16x128xf32, #tpu.memory_space<vmem>>, vector<16x128xf32>
    tpu.vector_store %arg4[%c0_13, %c0_14], %30 {strides = array<i32>} : memref<16x128xf32, #tpu.memory_space<vmem>>, vector<16x128xf32>,
    return
  }
  func.func @transform_0(%arg0: i32) -> (i32, i32) {
    %c0_i32 = arith.constant 0 : i32
    %c0_i32_0 = arith.constant 0 : i32
    return %arg0, %c0_i32 : i32, i32
  }
  func.func @transform_1(%arg0: i32) -> (i32, i32) {
    %c0_i32 = arith.constant 0 : i32
    %c0_i32_0 = arith.constant 0 : i32
    %c0_i32_1 = arith.constant 0 : i32
    return %c0_i32, %c0_i32_0 : i32, i32
  }
  func.func @transform_2(%arg0: i32) -> (i32, i32) {
    %c0_i32 = arith.constant 0 : i32
    %c0_i32_0 = arith.constant 0 : i32
    %c0_i32_1 = arith.constant 0 : i32
    return %c0_i32, %c0_i32_0 : i32, i32
  }
  func.func @transform_3(%arg0: i32) -> (i32, i32) {
    %c0_i32 = arith.constant 0 : i32
    %c0_i32_0 = arith.constant 0 : i32
    return %arg0, %c0_i32 : i32, i32
  }
}

</mosaic_0001>

<llo_original>
// kernel: patch_embedding.2
$region0: #{patch_embedding.2}
  #allocation0 [shape = 'u32[]', space=smem, size = 0x4, offset = 0x4, fixed_abs, tag = 'smem constant byte address 0x4 - core index']
  #allocation1 [shape = 'u32[144,128]{1,0:T(1,128)}', space=vmem, size = 0x12000, scoped, tag = 'internal scratch']
  #allocation2 [shape = 'u32[2048]{0}', space=vmem, size = 0x2000, scoped, tag = 'scoped memory for patch_embedding.2']
  #allocation3 [shape = 'u32[2048]{0}', space=vmem, size = 0x2000, scoped, tag = 'scoped memory for patch_embedding.2']
  #allocation4 [shape = 'u32[2048]{0}', space=vmem, size = 0x2000, scoped, tag = 'scoped memory for patch_embedding.2']
  #allocation5 [shape = 'u32[2048]{0}', space=vmem, size = 0x2000, scoped, tag = 'scoped memory for patch_embedding.2']
  #allocation6 [shape = 'u32[2048]{0}', space=vmem, size = 0x2000, scoped, tag = 'scoped memory for patch_embedding.2']
  %s0 = inlined_call_operand.vmem [shape: bf16[128,128], index: 0, kind: input, shape index: {}]
  %s1 = inlined_call_operand.vmem [shape: f32[8,128], index: 1, kind: input, shape index: {}]
  %s2 = inlined_call_operand.vmem [shape: bf16[32,64], index: 2, kind: input, shape index: {}]
  %s3 = inlined_call_operand.<no memory space> [shape: bf16[], index: 3, kind: input, shape index: {}]
  %s4 = inlined_call_operand.hbm [shape: f32[32,128], index: 4, kind: output, shape index: {}]
  %s5 = sld [smem:[#allocation0]]
  $region45: #{patch_embedding.2} parent=0
    _
  %s7 = ssub.s32 1, %s5
  %s8 = scalar_select 0, %s7, %s5
  %v9 = vstv %s3
  %v10 = vunpack.i.l.bf16 %v9
  %v12 = vunpack.i.h.bf16 %v9
  $region1: #{patch_embedding.2} parent=0
    #allocation7 [shape = 'u8[16384]{0}', space=vmem, size = 0x4000, scoped, tag = 'output window, operand 0']
    #allocation8 [shape = 's32[2]{0}', space=sflag, size = 0x8, scoped, tag = 'scoped memory for patch_embedding.2']
    %14 = vsyncpa [#allocation8], 0
    %s15 = scalar_lea.sflag [#allocation8], 1
    %16 = vsyncpa %s15, 0
    loop: start=0, step=1, limit=4
    $region2: #{patch_embedding.2} parent=1 // loop_pre_header
      _
    $region3: #{patch_embedding.2} parent=1 // loop_header
      %s18 = sphi 0, %s22
      %p19 = scmp.ge.s32.totalorder %s18, 4
      %s28 = sphi 0, %s30
      %s31 = sphi 0, %s28
      %s32 = sphi 0, %s31
      %s48 = sphi 0, %s32
      %s52 = sphi 0, %s52
      %s54 = sphi 0, %s52
      %s55 = sphi 0, %s54
      %s69 = sphi 0, %s55
      %s73 = sphi 0, %s73
      %s75 = sphi 0, %s73
      %s76 = sphi 0, %s75
      %s90 = sphi 0, %s76
      %s96 = sphi 0, %s98
      %s99 = sphi 0, %s96
      %s100 = sphi 0, %s99
      %s116 = sphi 0, %s100
    $region4: #{patch_embedding.2} parent=1 // loop_header_branch
      %21 = sbr.rel (%p19) target = $region8
    $region5: #{patch_embedding.2} parent=1 // loop_body
      %s23 = ssub.s32 %s18, 1
      %s24 = ssub.s32 %s18, 2
      %s25 = sadd.s32 %s18, 1
      %s26 = ssub.s32 %s18, %s25
      %p27 = scmp.eq.s32.totalorder %s26, 0
      %s29 = sadd.s32 %s28, 1
      %s30 = scalar_select %p27, %s28, %s29
      %p33 = pneg %p27
      %p34 = scmp.eq.s32.totalorder %s18, 1
      %p35 = por %p33, %p34
      %p36 = scmp.ne.s32.totalorder %s28, %s31
      %p37 = scmp.eq.s32.totalorder %s18, 0
      %p38 = por %p36, %p37
      %p39 = scmp.ne.s32.totalorder %s28, %s31
      %p40 = scmp.eq.s32.totalorder %s23, 1
      %p41 = por %p39, %p40
      %p42 = scmp.ne.s32.totalorder %s31, %s32
      %p43 = scmp.eq.s32.totalorder %s23, 0
      %p44 = por %p42, %p43
      %p45 = scmp.ne.s32.totalorder %s31, %s32
      %p46 = scmp.eq.s32.totalorder %s24, 1
      %p47 = por %p45, %p46
      %p49 = scmp.ne.s32.totalorder %s32, %s48
      %p50 = scmp.eq.s32.totalorder %s24, 0
      %p51 = por %p49, %p50
      %s53 = sadd.s32 %s52, 1
      %p56 = scmp.eq.s32.totalorder %s18, 1
      %p57 = scmp.ne.s32.totalorder %s52, %s54
      %p58 = scmp.eq.s32.totalorder %s18, 0
      %p59 = por %p57, %p58
      %p60 = scmp.ne.s32.totalorder %s52, %s54
      %p61 = scmp.eq.s32.totalorder %s23, 1
      %p62 = por %p60, %p61
      %p63 = scmp.ne.s32.totalorder %s54, %s55
      %p64 = scmp.eq.s32.totalorder %s23, 0
      %p65 = por %p63, %p64
      %p66 = scmp.ne.s32.totalorder %s54, %s55
      %p67 = scmp.eq.s32.totalorder %s24, 1
      %p68 = por %p66, %p67
      %p70 = scmp.ne.s32.totalorder %s55, %s69
      %p71 = scmp.eq.s32.totalorder %s24, 0
      %p72 = por %p70, %p71
      %s74 = sadd.s32 %s73, 1
      %p77 = scmp.eq.s32.totalorder %s18, 1
      %p78 = scmp.ne.s32.totalorder %s73, %s75
      %p79 = scmp.eq.s32.totalorder %s18, 0
      %p80 = por %p78, %p79
      %p81 = scmp.ne.s32.totalorder %s73, %s75
      %p82 = scmp.eq.s32.totalorder %s23, 1
      %p83 = por %p81, %p82
      %p84 = scmp.ne.s32.totalorder %s75, %s76
      %p85 = scmp.eq.s32.totalorder %s23, 0
      %p86 = por %p84, %p85
      %p87 = scmp.ne.s32.totalorder %s75, %s76
      %p88 = scmp.eq.s32.totalorder %s24, 1
      %p89 = por %p87, %p88
      %p91 = scmp.ne.s32.totalorder %s76, %s90
      %p92 = scmp.eq.s32.totalorder %s24, 0
      %p93 = por %p91, %p92
      %s94 = ssub.s32 %s18, %s25
      %p95 = scmp.eq.s32.totalorder %s94, 0
      %s97 = sadd.s32 %s96, 1
      %s98 = scalar_select %p95, %s96, %s97
      %p101 = pneg %p95
      %p102 = scmp.eq.s32.totalorder %s18, 1
      %p103 = por %p101, %p102
      %p104 = scmp.ne.s32.totalorder %s96, %s99
      %p105 = scmp.eq.s32.totalorder %s18, 0
      %p106 = por %p104, %p105
      %p107 = scmp.ne.s32.totalorder %s96, %s99
      %p108 = scmp.eq.s32.totalorder %s23, 1
      %p109 = por %p107, %p108
      %p110 = scmp.ne.s32.totalorder %s99, %s100
      %p111 = scmp.eq.s32.totalorder %s23, 0
      %p112 = por %p110, %p111
      %p113 = scmp.ne.s32.totalorder %s99, %s100
      %p114 = scmp.eq.s32.totalorder %s24, 1
      %p115 = por %p113, %p114
      %p117 = scmp.ne.s32.totalorder %s100, %s116
      %p118 = scmp.eq.s32.totalorder %s24, 0
      %p119 = por %p117, %p118
      %p120 = scmp.le.s32.totalorder 1, %s18
      %p121 = scmp.lt.s32.totalorder %s18, 3
      %p122 = pnand %p120, %p121
      %p123 = pneg %p122
      // Predicated region
      $region9: #{patch_embedding.2} parent=5 // pred_check
        _
      $region10: #{patch_embedding.2} parent=5 // pred_check_branch
        %125 = sbr.rel (%p122) target = $region12
      $region11: #{patch_embedding.2} parent=5 // pred_region
        %s126 = ssub.s32 %s18, 1
        // Predicated region
        $region13: #{patch_embedding.2} parent=11 // pred_check
          %p127 = pneg %p65
        $region14: #{patch_embedding.2} parent=11 // pred_check_branch
          %129 = sbr.rel (%p127) target = $region16
        $region15: #{patch_embedding.2} parent=11 // pred_region
          _
        $region16: #{patch_embedding.2} parent=11 // pred_fallthru
          _
        // Predicated region
        $region17: #{patch_embedding.2} parent=11 // pred_check
          %p130 = pneg %p86
        $region18: #{patch_embedding.2} parent=11 // pred_check_branch
          %132 = sbr.rel (%p130) target = $region20
        $region19: #{patch_embedding.2} parent=11 // pred_region
          _
        $region20: #{patch_embedding.2} parent=11 // pred_fallthru
          _
      $region12: #{patch_embedding.2} parent=5 // pred_fallthru
        _
      %p133 = scmp.lt.s32.totalorder %s18, 2
      // Predicated region
      $region21: #{patch_embedding.2} parent=5 // pred_check
        %p134 = pneg %p133
      $region22: #{patch_embedding.2} parent=5 // pred_check_branch
        %136 = sbr.rel (%p134) target = $region24
      $region23: #{patch_embedding.2} parent=5 // pred_region
        // Predicated region
        $region25: #{patch_embedding.2} parent=23 // pred_check
          %p137 = pneg %p38
        $region26: #{patch_embedding.2} parent=23 // pred_check_branch
          %139 = sbr.rel (%p137) target = $region28
        $region27: #{patch_embedding.2} parent=23 // pred_region
          %s140 = smul.u32 2, %s18
          %p141 = scmp.lt.s32.totalorder %s140, 3
          %s142 = scalar_select %p141, %s140, 3
          %s143 = smul.addr %s142, 4
          %s144 = scalar_lea.vmem %s2, %s143
          %s145 = smul.u32 2, %s18
        $region28: #{patch_embedding.2} parent=23 // pred_fallthru
          _
      $region24: #{patch_embedding.2} parent=5 // pred_fallthru
        _
      %p146 = scmp.le.s32.totalorder 1, %s18
      %p147 = scmp.lt.s32.totalorder %s18, 3
      %p148 = pnand %p146, %p147
      %p149 = pneg %p148
      // Predicated region
      $region29: #{patch_embedding.2} parent=5 // pred_check
        _
      $region30: #{patch_embedding.2} parent=5 // pred_check_branch
        %151 = sbr.rel (%p148) target = $region32
      $region31: #{patch_embedding.2} parent=5 // pred_region
        #allocation9 [shape = 'u8[4096]{0}', space=vmem, size = 0x1000, dematerialized = true, scoped, tag = 'FusionAdapter Buffer %fusion.1 = bf16[32,128]{1,0:T(8,128)(2,1)} fusion(%param_2.1, %param_3), kind=kLoop, calls=%fused_computation.2.clone, metadata={op_name="jit(patch_embedding)/jit(_pad)/pad" stack_frame_id=11}']
        %s152 = ssub.s32 %s18, 1
        %s153 = smul.u32 2, %s23
        %p154 = scmp.lt.s32.totalorder %s153, 3
        %s155 = scalar_select %p154, %s153, 3
        %s156 = smul.addr %s155, 4
        %s157 = scalar_lea.vmem %s2, %s156
        %p158 = pneg %p44
        %p159 = pneg %p41
        %p160 = pneg %p65
        %p161 = pneg %p62
        %p162 = pneg %p86
        %p163 = pneg %p83
        %p164 = pneg %p112
        %p165 = pneg %p109
        %s166 = sand.u32 %s99, 1
        %s167 = scalar_lea.sflag [#allocation8], %s166
        %s168 = sand.u32 %s99, 1
        %s169 = smul.addr %s168, 16
        %s170 = scalar_lea.vmem [#allocation7], %s169
        %s171 = smul.u32 2, %s23
        %p172 = scmp.lt.s32.totalorder %s171, 3
        %s173 = scalar_select %p172, %s171, 3
        %s174 = smul.addr %s173, 4
        %s175 = scalar_lea.vmem %s2, %s174
        %s176 = smul.u32 2, %s23
        %s177 = smul.u32 2, %s23
        %s179 = sor.u32 255, 127
        %s180 = sand.u32 %s179, 85
        %s181 = sshrl.u32 %s180, 1
        %s182 = sor.u32 %s180, %s181
        %s183 = sand.u32 51, %s182
        %s184 = sshrl.u32 %s183, 2
        %s185 = sor.u32 %s183, %s184
        %s186 = sand.u32 15, %s185
        %v187 = vld [vmem:[%s175] sm:%s186]
        %v188 = vunpack.c.l.bf16 %v187
        %v189 = vunpack.c.h.bf16 %v187
        %v190 = vlaneseq
        %v191 = vand.u32 %v190, 127
        %vm193 = vcmp.lt.s32.totalorder %v191, 64
        %v194 = vsel %vm193, %v188, %v10
        %v195 = vpack.c.bf16 0.0, %v194
        %197 = vst [vmem:[#allocation9] sm:$0xf] %v195
        %s198 = scalar_lea.vmem %s175, 4
        %s200 = sor.u32 255, 127
        %s201 = sand.u32 %s200, 85
        %s202 = sshrl.u32 %s201, 1
        %s203 = sor.u32 %s201, %s202
        %s204 = sand.u32 51, %s203
        %s205 = sshrl.u32 %s204, 2
        %s206 = sor.u32 %s204, %s205
        %s207 = sand.u32 15, %s206
        %v208 = vld [vmem:[%s198] sm:%s207]
        %v209 = vunpack.c.l.bf16 %v208
        %v210 = vunpack.c.h.bf16 %v208
        %v211 = vlaneseq
        %v212 = vand.u32 %v211, 127
        %vm214 = vcmp.lt.s32.totalorder %v212, 64
        %v215 = vsel %vm214, %v209, %v10
        %s216 = scalar_lea.vmem [#allocation9], 4
        %v217 = vpack.c.bf16 0.0, %v215
        %219 = vst [vmem:[%s216] sm:$0xf] %v217
        %v221 = vld [vmem:[#allocation9] sm:$0xf]
        %v222 = vld [vmem:[#allocation9 + $0x4] sm:$0xf]
        %v223 = vld [vmem:[%s0] sm:$0xf]
        %v224 = vld [vmem:[%s0 + $0x4] sm:$0xf]
        %v225 = vld [vmem:[%s0 + $0x8] sm:$0xf]
        %v226 = vld [vmem:[%s0 + $0xc] sm:$0xf]
        %v227 = vld [vmem:[%s0 + $0x10] sm:$0xf]
        %v228 = vld [vmem:[%s0 + $0x14] sm:$0xf]
        %v229 = vld [vmem:[%s0 + $0x18] sm:$0xf]
        %v230 = vld [vmem:[%s0 + $0x1c] sm:$0xf]
        %v231 = vld [vmem:[%s0 + $0x20] sm:$0xf]
        %v232 = vld [vmem:[%s0 + $0x24] sm:$0xf]
        %v233 = vld [vmem:[%s0 + $0x28] sm:$0xf]
        %v234 = vld [vmem:[%s0 + $0x2c] sm:$0xf]
        %v235 = vld [vmem:[%s0 + $0x30] sm:$0xf]
        %v236 = vld [vmem:[%s0 + $0x34] sm:$0xf]
        %v237 = vld [vmem:[%s0 + $0x38] sm:$0xf]
        %v238 = vld [vmem:[%s0 + $0x3c] sm:$0xf]
        %v239 = vld [vmem:[%s1] sm:$0x1]
        %v240 = vlaneseq
        %v241 = vshrl.u32 %v240, 7
        %v242 = vsub.s32 0, %v241
        %v243 = vrot.slane %v239, %v242
        %v246 = vunpack.c.l.b16 %v221
        %v247 = vunpack.c.l.b16 %v222
        %v248 = vpack.c.b16 %v247, %v246
        %v266 = vunpack.c.l.b16 %v223
        %v267 = vunpack.c.l.b16 %v224
        %v268 = vunpack.c.l.b16 %v225
        %v269 = vunpack.c.l.b16 %v226
        %v270 = vunpack.c.l.b16 %v227
        %v271 = vunpack.c.l.b16 %v228
        %v272 = vunpack.c.l.b16 %v229
        %v273 = vunpack.c.l.b16 %v230
        %v274 = vunpack.c.l.b16 %v231
        %v275 = vunpack.c.l.b16 %v232
        %v276 = vunpack.c.l.b16 %v233
        %v277 = vunpack.c.l.b16 %v234
        %v278 = vunpack.c.l.b16 %v235
        %v279 = vunpack.c.l.b16 %v236
        %v280 = vunpack.c.l.b16 %v237
        %v281 = vunpack.c.l.b16 %v238
        %v282 = vpack.c.b16 %v267, %v266
        %v283 = vpack.c.b16 %v269, %v268
        %v284 = vpack.c.b16 %v271, %v270
        %v285 = vpack.c.b16 %v273, %v272
        %v286 = vpack.c.b16 %v275, %v274
        %v287 = vpack.c.b16 %v277, %v276
        %v288 = vpack.c.b16 %v279, %v278
        %v289 = vpack.c.b16 %v281, %v280
        %298 = vmatprep.subr.bf16.mxu0 0
        %299 = vmatpush1.bf16.msra.mxu0 %v282
        %300 = vmatprep.subr.bf16.mxu0 0
        %301 = vmatpush1.bf16.msra.mxu0 %v283
        %302 = vmatprep.subr.bf16.mxu0 0
        %303 = vmatpush1.bf16.msra.mxu0 %v284
        %304 = vmatprep.subr.bf16.mxu0 0
        %305 = vmatpush1.bf16.msra.mxu0 %v285
        %306 = vmatprep.subr.bf16.mxu0 0
        %307 = vmatpush1.bf16.msra.mxu0 %v286
        %308 = vmatprep.subr.bf16.mxu0 0
        %309 = vmatpush1.bf16.msra.mxu0 %v287
        %310 = vmatprep.subr.bf16.mxu0 0
        %311 = vmatpush1.bf16.msra.mxu0 %v288
        %312 = vmatprep.subr.bf16.mxu0 0
        %313 = vmatpush1.bf16.msra.mxu0 %v289
        %314 = vmatprep.subr.bf16.mxu0 0
        %315 = vmatpush1.bf16.msra.mxu0 0
        %316 = vmatprep.subr.bf16.mxu0 0
        %317 = vmatpush1.bf16.msra.mxu0 0
        %318 = vmatprep.subr.bf16.mxu0 0
        %319 = vmatpush1.bf16.msra.mxu0 0
        %320 = vmatprep.subr.bf16.mxu0 0
        %321 = vmatpush1.bf16.msra.mxu0 0
        %322 = vmatprep.subr.bf16.mxu0 0
        %323 = vmatpush1.bf16.msra.mxu0 0
        %324 = vmatprep.subr.bf16.mxu0 0
        %325 = vmatpush1.bf16.msra.mxu0 0
        %326 = vmatprep.subr.bf16.mxu0 0
        %327 = vmatpush1.bf16.msra.mxu0 0
        %328 = vmatprep.subr.bf16.mxu0 0
        %329 = vmatpush1.bf16.msra.mxu0 0
        %330 = vmatprep.mubr.bf16.mxu0 0
        %331 = vmatmul.mubr.bf16.gmra.mrb[0].mxu0 %v248
        %v332 = vpop.f32.mrb[0].mxu0
        %v333 = vadd.f32 %v243, %v332
        %v334 = vpop.f32.mrb[0].mxu0
        %v335 = vpop.f32.mrb[0].mxu0
        %v336 = vadd.f32 %v243, %v335
        %v337 = vpop.f32.mrb[0].mxu0
        %338 = vdwg.mxu0
        %339 = vadd.xlane.f32.xlu0 %v333
        %v340 = vpop.xlane.xlu0 %339
        %341 = vadd.xlane.f32.xlu0 %v336
        %v342 = vpop.xlane.xlu0 %341
        %v343 = vmul.f32 %v340, 0.03125
        %v344 = vmul.f32 %v342, 0.03125
        %v345 = vsub.f32 %v333, %v343
        %v346 = vsub.f32 %v336, %v344
        %v347 = vld [vmem:[%s1 + $0x3] sm:$0x1]
        %v348 = vlaneseq
        %v349 = vshrl.u32 %v348, 7
        %v350 = vsub.s32 0, %v349
        %v351 = vrot.slane %v347, %v350
        %v352 = vmul.f32 %v345, %v351
        %v353 = vmul.f32 %v346, %v351
        %v354 = vmul.f32 %v352, %v352
        %v355 = vmul.f32 %v353, %v353
        %356 = vadd.xlane.f32.xlu0 %v354
        %v357 = vpop.xlane.xlu0 %356
        %358 = vadd.xlane.f32.xlu0 %v355
        %v359 = vpop.xlane.xlu0 %358
        %v360 = vmul.f32 %v357, 0.03125
        %v361 = vmul.f32 %v359, 0.03125
        %v362 = vadd.f32 %v360, 1e-05
        %v363 = vadd.f32 %v361, 1e-05
        %v364 = vrsqrt.pop %v362
        %v365 = vrsqrt.pop %v363
        %v366 = vmul.f32 %v352, %v364
        %v367 = vmul.f32 %v353, %v365
        %v368 = vld [vmem:[%s1 + $0x1] sm:$0x1]
        %v369 = vlaneseq
        %v370 = vshrl.u32 %v369, 7
        %v371 = vsub.s32 0, %v370
        %v372 = vrot.slane %v368, %v371
        %v373 = vmul.f32 %v366, %v372
        %v374 = vmul.f32 %v367, %v372
        %v375 = vld [vmem:[%s1 + $0x2] sm:$0x1]
        %v376 = vlaneseq
        %v377 = vshrl.u32 %v376, 7
        %v378 = vsub.s32 0, %v377
        %v379 = vrot.slane %v375, %v378
        %v380 = vadd.f32 %v373, %v379
        %v381 = vadd.f32 %v374, %v379
        %382 = vst [vmem:[%s170] sm:$0xff] %v380
        %383 = vst [vmem:[%s170 + $0x8] sm:$0xff] %v381
        %s384 = sand.u32 %s99, 1
        %s385 = scalar_lea.sflag [#allocation8], %s384
        %s386 = sand.u32 %s99, 1
        %s387 = smul.addr %s386, 16
        %s388 = scalar_lea.vmem [#allocation7], %s387
        // Predicated region
        $region33: #{patch_embedding.2} parent=31 // pred_check
          %p389 = pneg %p109
        $region34: #{patch_embedding.2} parent=31 // pred_check_branch
          %391 = sbr.rel (%p389) target = $region36
        $region35: #{patch_embedding.2} parent=31 // pred_region
          %s392 = smul.u32 2, %s23
          %s394 = ssub.s32 256, 256
          %395 = vsyncadd %s385, %s394
          %s396 = smul.addr %s392, 128
          %s397 = scalar_lea.hbm %s4, %s396
          %s398 = sshll.u32 %s388, 4
          %s399 = int_to_ptr.vmem [resolvable:$true] %s398
          %404 = dma.vmem_to_hbm [thread:$0]  %s399, 256, %s397, %s385, 128, 128, 8
        $region36: #{patch_embedding.2} parent=31 // pred_fallthru
          _
      $region32: #{patch_embedding.2} parent=5 // pred_fallthru
        _
      %p405 = scmp.le.s32.totalorder 2, %s18
      // Predicated region
      $region37: #{patch_embedding.2} parent=5 // pred_check
        %p406 = pneg %p405
      $region38: #{patch_embedding.2} parent=5 // pred_check_branch
        %408 = sbr.rel (%p406) target = $region40
      $region39: #{patch_embedding.2} parent=5 // pred_region
        %s409 = ssub.s32 %s18, 2
        // Predicated region
        $region41: #{patch_embedding.2} parent=39 // pred_check
          %p410 = pneg %p115
        $region42: #{patch_embedding.2} parent=39 // pred_check_branch
          %412 = sbr.rel (%p410) target = $region44
        $region43: #{patch_embedding.2} parent=39 // pred_region
          %s413 = sand.u32 %s100, 1
          %s414 = scalar_lea.sflag [#allocation8], %s413
          %s415 = sand.u32 %s100, 1
          %s416 = smul.addr %s415, 16
          %s417 = scalar_lea.vmem [#allocation7], %s416
          %418 = dma.done %s414, 256
        $region44: #{patch_embedding.2} parent=39 // pred_fallthru
          _
      $region40: #{patch_embedding.2} parent=5 // pred_fallthru
        _
    $region6: #{patch_embedding.2} parent=1 // loop_footer
      %s22 = sadd.s32 1, %s18
    $region7: #{patch_embedding.2} parent=1 // loop_footer_branch
      %17 = sbr.rel target = $region3
    $region8: #{patch_embedding.2} parent=1 // loop_exit
      _
    %419 = vsyncpa [#allocation8], 1
    %s420 = scalar_lea.sflag [#allocation8], 1
    %421 = vsyncpa %s420, 1

</llo_original>
